<compile_context>
chip_gen: v7x
topology: tpu7x:2x2x1
jax: 0.10.0
libtpu: 0.0.40
codegen_flags: <defaults>
</compile_context>

<pallas_src>
import functools

import numpy as np
import jax
import jax.numpy as jnp
from jax.experimental import pallas as pl
from jax.experimental.pallas import tpu as pltpu

COMBINED_OUTPUT = 64
LAYER_DIMS = [(COMBINED_OUTPUT, 256), (256, 256), (256, 128), (128, 128), (128, 1)]


# ----------------------------- Pallas kernel -----------------------------

def _critic_kernel(x_ref,
                   w0_ref, b0_ref,
                   w1_ref, b1_ref,
                   w2_ref, b2_ref,
                   w3_ref, b3_ref,
                   w4_ref, b4_ref,
                   o_ref):
    """Fused 5-layer MLP: (ReLU o Linear) x4 followed by a final Linear."""
    h = x_ref[...]

    h = jnp.dot(h, w0_ref[...], preferred_element_type=jnp.float32) + b0_ref[...]
    h = jnp.maximum(h, 0.0)

    h = jnp.dot(h, w1_ref[...], preferred_element_type=jnp.float32) + b1_ref[...]
    h = jnp.maximum(h, 0.0)

    h = jnp.dot(h, w2_ref[...], preferred_element_type=jnp.float32) + b2_ref[...]
    h = jnp.maximum(h, 0.0)

    h = jnp.dot(h, w3_ref[...], preferred_element_type=jnp.float32) + b3_ref[...]
    h = jnp.maximum(h, 0.0)

    # final Linear(128, 1): no activation
    o_ref[...] = jnp.dot(h, w4_ref[...], preferred_element_type=jnp.float32) + b4_ref[...]


def critic_pallas(x, params):
    """x: (B, 64) f32.  params: list of 5 (w, b) pairs, w:(in,out), b:(out,).

    Entire weight set (~525 KB) + activations live in VMEM for the whole call,
    so a single un-gridded pallas_call is both the simplest and the fastest
    structure for this model on v5e / v6e / v7x.
    """
    B, K = x.shape
    assert K == COMBINED_OUTPUT

    flat_args = [x.astype(jnp.float32)]
    for (fi, fo), (w, b) in zip(LAYER_DIMS, params):
        assert w.shape == (fi, fo) and b.shape == (fo,)
        flat_args.append(w)
        flat_args.append(b.reshape(1, fo))   # 2D bias -> clean lane broadcast

    vmem_spec = pl.BlockSpec(memory_space=pltpu.MemorySpace.VMEM)

    return pl.pallas_call(
        _critic_kernel,
        out_shape=jax.ShapeDtypeStruct((B, 1), jnp.float32),
        in_specs=[vmem_spec] * len(flat_args),
        out_specs=vmem_spec,
    )(*flat_args)


@functools.partial(jax.jit, static_argnums=())
def critic_forward(params, x):
    """jit-wrapped forward: one XLA launch, one Pallas kernel, array output."""
    return critic_pallas(x, params)


# --------------------------- parameter init --------------------------------

def _linear_params(key, fan_in, fan_out):
    """PyTorch nn.Linear default init: U(-1/sqrt(fan_in), 1/sqrt(fan_in))."""
    kw, kb = jax.random.split(key)
    bound = 1.0 / np.sqrt(fan_in)
    w = jax.random.uniform(kw, (fan_in, fan_out), jnp.float32, -bound, bound)
    b = jax.random.uniform(kb, (fan_out,), jnp.float32, -bound, bound)
    return w, b


def init_params(seed=1234):
    keys = jax.random.split(jax.random.PRNGKey(seed), len(LAYER_DIMS))
    return [_linear_params(k, fi, fo) for k, (fi, fo) in zip(keys, LAYER_DIMS)]


# ------------------------------ reference -----------------------------------

def critic_reference(params, x):
    h = x.astype(jnp.float32)
    for i, (w, b) in enumerate(params):
        h = h @ w + b
        if i < len(params) - 1:
            h = jnp.maximum(h, 0.0)
    return h


# ------------------------------- main ---------------------------------------

if __name__ == "__main__":
    # TODO(synk): the optimizer / step_optimizer (Adam update) is training-side
    # state and is not part of the forward pass, so it is not implemented here.
    key = jax.random.PRNGKey(0)
    kx, _ = jax.random.split(key)

    B = 2
    x = jax.random.normal(kx, (B, COMBINED_OUTPUT), jnp.float32)

    params = init_params(seed=1234)

    out = critic_forward(params, x)
    out = jax.block_until_ready(out)

    ref = critic_reference(params, x)
    np.testing.assert_allclose(np.asarray(out), np.asarray(ref),
                               rtol=1e-4, atol=1e-5)

    assert out.shape == (B, 1)
    print("KERNEL_OK")
</pallas_src>

<mosaic_0001>
module attributes {stable_mosaic.version = 11 : i64} {
  func.func @_critic_kernel(%arg0: memref<2x64xf32, #tpu.memory_space<vmem>>, %arg1: memref<64x256xf32, #tpu.memory_space<vmem>>, %arg2: memref<1x256xf32, #tpu.memory_space<vmem>>, %arg3: memref<256x256xf32, #tpu.memory_space<vmem>>, %arg4: memref<1x256xf32, #tpu.memory_space<vmem>>, %arg5: memref<256x128xf32, #tpu.memory_space<vmem>>, %arg6: memref<1x128xf32, #tpu.memory_space<vmem>>, %arg7: memref<128x128xf32, #tpu.memory_space<vmem>>, %arg8: memref<1x128xf32, #tpu.memory_space<vmem>>, %arg9: memref<128x1xf32, #tpu.memory_space<vmem>>, %arg10: memref<1x1xf32, #tpu.memory_space<vmem>>, %arg11: memref<2x1xf32, #tpu.memory_space<vmem>>) attributes {dimension_semantics = [], scalar_prefetch = 0 : i64, scratch_operands = 0 : i64, tpu.core_type = #tpu.core_type<tc>} {
    %c0 = arith.constant 0 : index
    %c0_0 = arith.constant 0 : index
    %0 = vector.load %arg0[%c0, %c0_0] : memref<2x64xf32, #tpu.memory_space<vmem>>, vector<2x64xf32>
    %c0_1 = arith.constant 0 : index
    %c0_2 = arith.constant 0 : index
    %1 = vector.load %arg1[%c0_1, %c0_2] : memref<64x256xf32, #tpu.memory_space<vmem>>, vector<64x256xf32>
    %cst = arith.constant dense<0.000000e+00> : vector<2x256xf32>
    %2 = tpu.matmul %0, %1, %cst {dimension_numbers = #tpu.dot_dimension_numbers<[1], [0], [0], [1], [0, 0, 1, 1], [], []>} : vector<2x64xf32>, vector<64x256xf32>, vector<2x256xf32> -> vector<2x256xf32>
    %c0_3 = arith.constant 0 : index
    %c0_4 = arith.constant 0 : index
    %3 = vector.load %arg2[%c0_3, %c0_4] : memref<1x256xf32, #tpu.memory_space<vmem>>, vector<1x256xf32>
    %4 = vector.broadcast %3 : vector<1x256xf32> to vector<2x256xf32>
    %5 = arith.addf %2, %4 : vector<2x256xf32>
    %cst_5 = arith.constant 0.000000e+00 : f32
    %6 = vector.broadcast %cst_5 : f32 to vector<2x256xf32>
    %7 = arith.maximumf %5, %6 : vector<2x256xf32>
    %c0_6 = arith.constant 0 : index
    %c0_7 = arith.constant 0 : index
    %8 = vector.load %arg3[%c0_6, %c0_7] : memref<256x256xf32, #tpu.memory_space<vmem>>, vector<256x256xf32>
    %cst_8 = arith.constant dense<0.000000e+00> : vector<2x256xf32>
    %9 = tpu.matmul %7, %8, %cst_8 {dimension_numbers = #tpu.dot_dimension_numbers<[1], [0], [0], [1], [0, 0, 1, 1], [], []>} : vector<2x256xf32>, vector<256x256xf32>, vector<2x256xf32> -> vector<2x256xf32>
    %c0_9 = arith.constant 0 : index
    %c0_10 = arith.constant 0 : index
    %10 = vector.load %arg4[%c0_9, %c0_10] : memref<1x256xf32, #tpu.memory_space<vmem>>, vector<1x256xf32>
    %11 = vector.broadcast %10 : vector<1x256xf32> to vector<2x256xf32>
    %12 = arith.addf %9, %11 : vector<2x256xf32>
    %cst_11 = arith.constant 0.000000e+00 : f32
    %13 = vector.broadcast %cst_11 : f32 to vector<2x256xf32>
    %14 = arith.maximumf %12, %13 : vector<2x256xf32>
    %c0_12 = arith.constant 0 : index
    %c0_13 = arith.constant 0 : index
    %15 = vector.load %arg5[%c0_12, %c0_13] : memref<256x128xf32, #tpu.memory_space<vmem>>, vector<256x128xf32>
    %cst_14 = arith.constant dense<0.000000e+00> : vector<2x128xf32>
    %16 = tpu.matmul %14, %15, %cst_14 {dimension_numbers = #tpu.dot_dimension_numbers<[1], [0], [0], [1], [0, 0, 1, 1], [], []>} : vector<2x256xf32>, vector<256x128xf32>, vector<2x128xf32> -> vector<2x128xf32>
    %c0_15 = arith.constant 0 : index
    %c0_16 = arith.constant 0 : index
    %17 = vector.load %arg6[%c0_15, %c0_16] : memref<1x128xf32, #tpu.memory_space<vmem>>, vector<1x128xf32>
    %18 = vector.broadcast %17 : vector<1x128xf32> to vector<2x128xf32>
    %19 = arith.addf %16, %18 : vector<2x128xf32>
    %cst_17 = arith.constant 0.000000e+00 : f32
    %20 = vector.broadcast %cst_17 : f32 to vector<2x128xf32>
    %21 = arith.maximumf %19, %20 : vector<2x128xf32>
    %c0_18 = arith.constant 0 : index
    %c0_19 = arith.constant 0 : index
    %22 = vector.load %arg7[%c0_18, %c0_19] : memref<128x128xf32, #tpu.memory_space<vmem>>, vector<128x128xf32>
    %cst_20 = arith.constant dense<0.000000e+00> : vector<2x128xf32>
    %23 = tpu.matmul %21, %22, %cst_20 {dimension_numbers = #tpu.dot_dimension_numbers<[1], [0], [0], [1], [0, 0, 1, 1], [], []>} : vector<2x128xf32>, vector<128x128xf32>, vector<2x128xf32> -> vector<2x128xf32>
    %c0_21 = arith.constant 0 : index
    %c0_22 = arith.constant 0 : index
    %24 = vector.load %arg8[%c0_21, %c0_22] : memref<1x128xf32, #tpu.memory_space<vmem>>, vector<1x128xf32>
    %25 = vector.broadcast %24 : vector<1x128xf32> to vector<2x128xf32>
    %26 = arith.addf %23, %25 : vector<2x128xf32>
    %cst_23 = arith.constant 0.000000e+00 : f32
    %27 = vector.broadcast %cst_23 : f32 to vector<2x128xf32>
    %28 = arith.maximumf %26, %27 : vector<2x128xf32>
    %c0_24 = arith.constant 0 : index
    %c0_25 = arith.constant 0 : index
    %29 = vector.load %arg9[%c0_24, %c0_25] : memref<128x1xf32, #tpu.memory_space<vmem>>, vector<128x1xf32>
    %cst_26 = arith.constant dense<0.000000e+00> : vector<2x1xf32>
    %30 = tpu.matmul %28, %29, %cst_26 {dimension_numbers = #tpu.dot_dimension_numbers<[1], [0], [0], [1], [0, 0, 1, 1], [], []>} : vector<2x128xf32>, vector<128x1xf32>, vector<2x1xf32> -> vector<2x1xf32>
    %c0_27 = arith.constant 0 : index
    %c0_28 = arith.constant 0 : index
    %31 = vector.load %arg10[%c0_27, %c0_28] : memref<1x1xf32, #tpu.memory_space<vmem>>, vector<1x1xf32>
    %32 = vector.broadcast %31 : vector<1x1xf32> to vector<2x1xf32>
    %33 = arith.addf %30, %32 : vector<2x1xf32>
    %c0_29 = arith.constant 0 : index
    %c0_30 = arith.constant 0 : index
    %34 = vector.load %arg11[%c0_29, %c0_30] : memref<2x1xf32, #tpu.memory_space<vmem>>, vector<2x1xf32>
    tpu.vector_store %arg11[%c0_29, %c0_30], %33 {strides = array<i32>} : memref<2x1xf32, #tpu.memory_space<vmem>>, vector<2x1xf32>,
    return
  }
}

</mosaic_0001>

<llo_original>
// kernel: critic_forward.1
$region0: #{critic_forward.1}
  #allocation0 [shape = 'u32[]', space=smem, size = 0x4, offset = 0x4, fixed_abs, tag = 'smem constant byte address 0x4 - core index']
  #allocation1 [shape = 'u32[144,128]{1,0:T(1,128)}', space=vmem, size = 0x12000, scoped, tag = 'internal scratch']
  #allocation2 [shape = 'f32[1,1]{1,0:T(1,128)S(1)}', space=vmem, size = 0x200, scoped, tag = 'scoped memory for critic_forward.1']
  %s0 = inlined_call_operand.vmem [shape: f32[2,64], index: 0, kind: input, shape index: {}]
  %s1 = inlined_call_operand.vmem [shape: f32[64,256], index: 1, kind: input, shape index: {}]
  %s2 = inlined_call_operand.vmem [shape: f32[1,256], index: 2, kind: input, shape index: {}]
  %s3 = inlined_call_operand.hbm [shape: f32[256,256], index: 3, kind: input, shape index: {}]
  %s4 = inlined_call_operand.vmem [shape: f32[1,256], index: 4, kind: input, shape index: {}]
  %s5 = inlined_call_operand.hbm [shape: f32[256,128], index: 5, kind: input, shape index: {}]
  %s6 = inlined_call_operand.vmem [shape: f32[1,128], index: 6, kind: input, shape index: {}]
  %s7 = inlined_call_operand.hbm [shape: f32[128,128], index: 7, kind: input, shape index: {}]
  %s8 = inlined_call_operand.vmem [shape: f32[1,128], index: 8, kind: input, shape index: {}]
  %s9 = inlined_call_operand.vmem [shape: f32[128,1], index: 9, kind: input, shape index: {}]
  %s10 = inlined_call_operand.<no memory space> [shape: f32[1,1], index: 10, kind: input, shape index: {}]
  %s11 = inlined_call_operand.vmem [shape: f32[2,1], index: 11, kind: output, shape index: {}]
  %s12 = sld [smem:[#allocation0]]
  $region66: #{critic_forward.1} parent=0
    _
  %s14 = ssub.s32 1, %s12
  %s15 = scalar_select 0, %s14, %s12
  %v16 = vstv %s10
  %17 = vst [vmem:[#allocation2] sm:$0x1] %v16
  $region1: #{critic_forward.1} parent=0
    #allocation3 [shape = 'u8[262144]{0}', space=vmem, size = 0x40000, scoped, tag = 'input window, operand 3, single buffered']
    #allocation4 [shape = 's32[1]{0}', space=sflag, size = 0x4, scoped, tag = 'scoped memory for critic_forward.1']
    #allocation5 [shape = 'u8[131072]{0}', space=vmem, size = 0x20000, scoped, tag = 'input window, operand 5, single buffered']
    #allocation6 [shape = 's32[1]{0}', space=sflag, size = 0x4, scoped, tag = 'scoped memory for critic_forward.1']
    #allocation7 [shape = 'u8[65536]{0}', space=vmem, size = 0x10000, scoped, tag = 'input window, operand 7, single buffered']
    %18 = vsyncpa [#allocation4], 0
    %19 = vsyncpa [#allocation6], 0
    // Predicated region
    $region2: #{critic_forward.1} parent=1 // pred_check
      _
    $region3: #{critic_forward.1} parent=1 // pred_check_branch
      %21 = sbr.rel (0) target = $region5
    $region4: #{critic_forward.1} parent=1 // pred_region
      _
    $region5: #{critic_forward.1} parent=1 // pred_fallthru
      _
    // Predicated region
    $region6: #{critic_forward.1} parent=1 // pred_check
      _
    $region7: #{critic_forward.1} parent=1 // pred_check_branch
      %23 = sbr.rel (0) target = $region9
    $region8: #{critic_forward.1} parent=1 // pred_region
      _
    $region9: #{critic_forward.1} parent=1 // pred_fallthru
      _
    // Predicated region
    $region10: #{critic_forward.1} parent=1 // pred_check
      _
    $region11: #{critic_forward.1} parent=1 // pred_check_branch
      %25 = sbr.rel (0) target = $region13
    $region12: #{critic_forward.1} parent=1 // pred_region
      _
    $region13: #{critic_forward.1} parent=1 // pred_fallthru
      _
    // Predicated region
    $region14: #{critic_forward.1} parent=1 // pred_check
      _
    $region15: #{critic_forward.1} parent=1 // pred_check_branch
      %27 = sbr.rel (0) target = $region17
    $region16: #{critic_forward.1} parent=1 // pred_region
      %s29 = ssub.s32 8192, 8192
      %30 = vsyncadd [#allocation4], %s29
      %s31 = sshll.u32 [#allocation3], 4
      %s32 = int_to_ptr.vmem [resolvable:$true] %s31
      %37 = dma.hbm_to_vmem [thread:$0]  %s3, 8192, %s32, [#allocation4], 256, 256, 16
    $region17: #{critic_forward.1} parent=1 // pred_fallthru
      _
    // Predicated region
    $region18: #{critic_forward.1} parent=1 // pred_check
      _
    $region19: #{critic_forward.1} parent=1 // pred_check_branch
      %39 = sbr.rel (0) target = $region21
    $region20: #{critic_forward.1} parent=1 // pred_region
      _
    $region21: #{critic_forward.1} parent=1 // pred_fallthru
      _
    // Predicated region
    $region22: #{critic_forward.1} parent=1 // pred_check
      _
    $region23: #{critic_forward.1} parent=1 // pred_check_branch
      %41 = sbr.rel (0) target = $region25
    $region24: #{critic_forward.1} parent=1 // pred_region
      %s43 = ssub.s32 4096, 4096
      %44 = vsyncadd [#allocation6], %s43
      %s45 = sshll.u32 [#allocation5], 4
      %s46 = int_to_ptr.vmem [resolvable:$true] %s45
      %51 = dma.hbm_to_vmem [thread:$0]  %s5, 4096, %s46, [#allocation6], 128, 128, 8
    $region25: #{critic_forward.1} parent=1 // pred_fallthru
      _
    // Predicated region
    $region26: #{critic_forward.1} parent=1 // pred_check
      _
    $region27: #{critic_forward.1} parent=1 // pred_check_branch
      %53 = sbr.rel (0) target = $region29
    $region28: #{critic_forward.1} parent=1 // pred_region
      _
    $region29: #{critic_forward.1} parent=1 // pred_fallthru
      _
    // Predicated region
    $region30: #{critic_forward.1} parent=1 // pred_check
      _
    $region31: #{critic_forward.1} parent=1 // pred_check_branch
      %55 = sbr.rel (0) target = $region33
    $region32: #{critic_forward.1} parent=1 // pred_region
      %s57 = ssub.s32 2048, 2048
      %58 = vsyncadd [#allocation6], %s57
      %s59 = sshll.u32 [#allocation7], 4
      %s60 = int_to_ptr.vmem [resolvable:$true] %s59
      %65 = dma.hbm_to_vmem [thread:$0]  %s7, 2048, %s60, [#allocation6], 128, 128, 8
    $region33: #{critic_forward.1} parent=1 // pred_fallthru
      _
    // Predicated region
    $region34: #{critic_forward.1} parent=1 // pred_check
      _
    $region35: #{critic_forward.1} parent=1 // pred_check_branch
      %67 = sbr.rel (0) target = $region37
    $region36: #{critic_forward.1} parent=1 // pred_region
      _
    $region37: #{critic_forward.1} parent=1 // pred_fallthru
      _
    // Predicated region
    $region38: #{critic_forward.1} parent=1 // pred_check
      _
    $region39: #{critic_forward.1} parent=1 // pred_check_branch
      %69 = sbr.rel (0) target = $region41
    $region40: #{critic_forward.1} parent=1 // pred_region
      _
    $region41: #{critic_forward.1} parent=1 // pred_fallthru
      _
    // Predicated region
    $region42: #{critic_forward.1} parent=1 // pred_check
      _
    $region43: #{critic_forward.1} parent=1 // pred_check_branch
      %71 = sbr.rel (0) target = $region45
    $region44: #{critic_forward.1} parent=1 // pred_region
      _
    $region45: #{critic_forward.1} parent=1 // pred_fallthru
      _
    // Predicated region
    $region46: #{critic_forward.1} parent=1 // pred_check
      _
    $region47: #{critic_forward.1} parent=1 // pred_check_branch
      %73 = sbr.rel (0) target = $region49
    $region48: #{critic_forward.1} parent=1 // pred_region
      %74 = dma.done [#allocation4], 8192
    $region49: #{critic_forward.1} parent=1 // pred_fallthru
      _
    // Predicated region
    $region50: #{critic_forward.1} parent=1 // pred_check
      _
    $region51: #{critic_forward.1} parent=1 // pred_check_branch
      %76 = sbr.rel (0) target = $region53
    $region52: #{critic_forward.1} parent=1 // pred_region
      %77 = dma.done [#allocation6], 4096
    $region53: #{critic_forward.1} parent=1 // pred_fallthru
      _
    // Predicated region
    $region54: #{critic_forward.1} parent=1 // pred_check
      _
    $region55: #{critic_forward.1} parent=1 // pred_check_branch
      %79 = sbr.rel (0) target = $region57
    $region56: #{critic_forward.1} parent=1 // pred_region
      %80 = dma.done [#allocation6], 2048
    $region57: #{critic_forward.1} parent=1 // pred_fallthru
      _
    %v81 = vld [vmem:[%s0] sm:$0x3]
    %v82 = vld [vmem:[%s1] sm:$0xff]
    %v83 = vld [vmem:[%s1 + $0x8] sm:$0xff]
    %v84 = vld [vmem:[%s1 + $0x10] sm:$0xff]
    %v85 = vld [vmem:[%s1 + $0x18] sm:$0xff]
    %v86 = vld [vmem:[%s1 + $0x20] sm:$0xff]
    %v87 = vld [vmem:[%s1 + $0x28] sm:$0xff]
    %v88 = vld [vmem:[%s1 + $0x30] sm:$0xff]
    %v89 = vld [vmem:[%s1 + $0x38] sm:$0xff]
    %v90 = vld [vmem:[%s1 + $0x40] sm:$0xff]
    %v91 = vld [vmem:[%s1 + $0x48] sm:$0xff]
    %v92 = vld [vmem:[%s1 + $0x50] sm:$0xff]
    %v93 = vld [vmem:[%s1 + $0x58] sm:$0xff]
    %v94 = vld [vmem:[%s1 + $0x60] sm:$0xff]
    %v95 = vld [vmem:[%s1 + $0x68] sm:$0xff]
    %v96 = vld [vmem:[%s1 + $0x70] sm:$0xff]
    %v97 = vld [vmem:[%s1 + $0x78] sm:$0xff]
    %v98 = vld [vmem:[%s2] sm:$0x3]
    %v100 = vlaneseq
    %v101 = vshrl.u32 %v100, 7
    %v102 = vsub.s32 0, %v101
    %v103 = vrot.slane %v98, %v102
    %v104 = vlaneseq
    %v105 = vshrl.u32 %v104, 7
    %v106 = vsub.s32 1, %v105
    %v107 = vrot.slane %v98, %v106
    %vm110 = vcmask 523264
    %v112 = vsel %vm110, %v81, 0
    %114 = vmatprep.subr.mxu0 %v83
    %115 = vmatpush1.msra.mxu0 %v82
    %116 = vmatprep.subr.mxu0 %v85
    %117 = vmatpush1.msra.mxu0 %v84
    %118 = vmatprep.subr.mxu0 %v87
    %119 = vmatpush1.msra.mxu0 %v86
    %120 = vmatprep.subr.mxu0 %v89
    %121 = vmatpush1.msra.mxu0 %v88
    %122 = vmatprep.subr.mxu0 %v91
    %123 = vmatpush1.msra.mxu0 %v90
    %124 = vmatprep.subr.mxu0 %v93
    %125 = vmatpush1.msra.mxu0 %v92
    %126 = vmatprep.subr.mxu0 %v95
    %127 = vmatpush1.msra.mxu0 %v94
    %128 = vmatprep.subr.mxu0 %v97
    %129 = vmatpush1.msra.mxu0 %v96
    %130 = vmatprep.subr.mxu0 0.0
    %131 = vmatpush1.msra.mxu0 0.0
    %132 = vmatprep.subr.mxu0 0.0
    %133 = vmatpush1.msra.mxu0 0.0
    %134 = vmatprep.subr.mxu0 0.0
    %135 = vmatpush1.msra.mxu0 0.0
    %136 = vmatprep.subr.mxu0 0.0
    %137 = vmatpush1.msra.mxu0 0.0
    %138 = vmatprep.subr.mxu0 0.0
    %139 = vmatpush1.msra.mxu0 0.0
    %140 = vmatprep.subr.mxu0 0.0
    %141 = vmatpush1.msra.mxu0 0.0
    %142 = vmatprep.subr.mxu0 0.0
    %143 = vmatpush1.msra.mxu0 0.0
    %144 = vmatprep.subr.mxu0 0.0
    %145 = vmatpush1.msra.mxu0 0.0
    %146 = vmatprep.subr.mxu0 0.0
    %147 = vmatpush1.msra.mxu0 0.0
    %148 = vmatprep.subr.mxu0 0.0
    %149 = vmatpush1.msra.mxu0 0.0
    %150 = vmatprep.subr.mxu0 0.0
    %151 = vmatpush1.msra.mxu0 0.0
    %152 = vmatprep.subr.mxu0 0.0
    %153 = vmatpush1.msra.mxu0 0.0
    %154 = vmatprep.subr.mxu0 0.0
    %155 = vmatpush1.msra.mxu0 0.0
    %156 = vmatprep.subr.mxu0 0.0
    %157 = vmatpush1.msra.mxu0 0.0
    %158 = vmatprep.subr.mxu0 0.0
    %159 = vmatpush1.msra.mxu0 0.0
    %160 = vmatprep.subr.mxu0 0.0
    %161 = vmatpush1.msra.mxu0 0.0
    %162 = vmatprep.subr.mxu0 0.0
    %163 = vmatpush1.msra.mxu0 0.0
    %164 = vmatprep.subr.mxu0 0.0
    %165 = vmatpush1.msra.mxu0 0.0
    %166 = vmatprep.subr.mxu0 0.0
    %167 = vmatpush1.msra.mxu0 0.0
    %168 = vmatprep.subr.mxu0 0.0
    %169 = vmatpush1.msra.mxu0 0.0
    %170 = vmatprep.subr.mxu0 0.0
    %171 = vmatpush1.msra.mxu0 0.0
    %172 = vmatprep.subr.mxu0 0.0
    %173 = vmatpush1.msra.mxu0 0.0
    %174 = vmatprep.subr.mxu0 0.0
    %175 = vmatpush1.msra.mxu0 0.0
    %176 = vmatprep.subr.mxu0 0.0
    %177 = vmatpush1.msra.mxu0 0.0
    %178 = vmatprep.mubr.f32.mxu0 0.0
    %179 = vmatmul.mubr.f32.gmra.mrb[0].mxu0 %v112
    %v180 = vpop.f32.mrb[0].mxu0
    %v181 = vadd.f32 %v103, %v180
    %v182 = vpop.f32.mrb[0].mxu0
    %v183 = vadd.f32 %v107, %v182
    %184 = vdwg.mxu0
    %v185 = vmax.f32 %v181, 0.0
    %v186 = vmax.f32 %v183, 0.0
    %v187 = vld [vmem:[#allocation3] sm:$0xff]
    %v188 = vld [vmem:[#allocation3 + $0x8] sm:$0xff]
    %v189 = vld [vmem:[#allocation3 + $0x10] sm:$0xff]
    %v190 = vld [vmem:[#allocation3 + $0x18] sm:$0xff]
    %v191 = vld [vmem:[#allocation3 + $0x20] sm:$0xff]
    %v192 = vld [vmem:[#allocation3 + $0x28] sm:$0xff]
    %v193 = vld [vmem:[#allocation3 + $0x30] sm:$0xff]
    %v194 = vld [vmem:[#allocation3 + $0x38] sm:$0xff]
    %v195 = vld [vmem:[#allocation3 + $0x40] sm:$0xff]
    %v196 = vld [vmem:[#allocation3 + $0x48] sm:$0xff]
    %v197 = vld [vmem:[#allocation3 + $0x50] sm:$0xff]
    %v198 = vld [vmem:[#allocation3 + $0x58] sm:$0xff]
    %v199 = vld [vmem:[#allocation3 + $0x60] sm:$0xff]
    %v200 = vld [vmem:[#allocation3 + $0x68] sm:$0xff]
    %v201 = vld [vmem:[#allocation3 + $0x70] sm:$0xff]
    %v202 = vld [vmem:[#allocation3 + $0x78] sm:$0xff]
    %v203 = vld [vmem:[#allocation3 + $0x80] sm:$0xff]
    %v204 = vld [vmem:[#allocation3 + $0x88] sm:$0xff]
    %v205 = vld [vmem:[#allocation3 + $0x90] sm:$0xff]
    %v206 = vld [vmem:[#allocation3 + $0x98] sm:$0xff]
    %v207 = vld [vmem:[#allocation3 + $0xa0] sm:$0xff]
    %v208 = vld [vmem:[#allocation3 + $0xa8] sm:$0xff]
    %v209 = vld [vmem:[#allocation3 + $0xb0] sm:$0xff]
    %v210 = vld [vmem:[#allocation3 + $0xb8] sm:$0xff]
    %v211 = vld [vmem:[#allocation3 + $0xc0] sm:$0xff]
    %v212 = vld [vmem:[#allocation3 + $0xc8] sm:$0xff]
    %v213 = vld [vmem:[#allocation3 + $0xd0] sm:$0xff]
    %v214 = vld [vmem:[#allocation3 + $0xd8] sm:$0xff]
    %v215 = vld [vmem:[#allocation3 + $0xe0] sm:$0xff]
    %v216 = vld [vmem:[#allocation3 + $0xe8] sm:$0xff]
    %v217 = vld [vmem:[#allocation3 + $0xf0] sm:$0xff]
    %v218 = vld [vmem:[#allocation3 + $0xf8] sm:$0xff]
    %v219 = vld [vmem:[#allocation3 + $0x100] sm:$0xff]
    %v220 = vld [vmem:[#allocation3 + $0x108] sm:$0xff]
    %v221 = vld [vmem:[#allocation3 + $0x110] sm:$0xff]
    %v222 = vld [vmem:[#allocation3 + $0x118] sm:$0xff]
    %v223 = vld [vmem:[#allocation3 + $0x120] sm:$0xff]
    %v224 = vld [vmem:[#allocation3 + $0x128] sm:$0xff]
    %v225 = vld [vmem:[#allocation3 + $0x130] sm:$0xff]
    %v226 = vld [vmem:[#allocation3 + $0x138] sm:$0xff]
    %v227 = vld [vmem:[#allocation3 + $0x140] sm:$0xff]
    %v228 = vld [vmem:[#allocation3 + $0x148] sm:$0xff]
    %v229 = vld [vmem:[#allocation3 + $0x150] sm:$0xff]
    %v230 = vld [vmem:[#allocation3 + $0x158] sm:$0xff]
    %v231 = vld [vmem:[#allocation3 + $0x160] sm:$0xff]
    %v232 = vld [vmem:[#allocation3 + $0x168] sm:$0xff]
    %v233 = vld [vmem:[#allocation3 + $0x170] sm:$0xff]
    %v234 = vld [vmem:[#allocation3 + $0x178] sm:$0xff]
    %v235 = vld [vmem:[#allocation3 + $0x180] sm:$0xff]
    %v236 = vld [vmem:[#allocation3 + $0x188] sm:$0xff]
    %v237 = vld [vmem:[#allocation3 + $0x190] sm:$0xff]
    %v238 = vld [vmem:[#allocation3 + $0x198] sm:$0xff]
    %v239 = vld [vmem:[#allocation3 + $0x1a0] sm:$0xff]
    %v240 = vld [vmem:[#allocation3 + $0x1a8] sm:$0xff]
    %v241 = vld [vmem:[#allocation3 + $0x1b0] sm:$0xff]
    %v242 = vld [vmem:[#allocation3 + $0x1b8] sm:$0xff]
    %v243 = vld [vmem:[#allocation3 + $0x1c0] sm:$0xff]
    %v244 = vld [vmem:[#allocation3 + $0x1c8] sm:$0xff]
    %v245 = vld [vmem:[#allocation3 + $0x1d0] sm:$0xff]
    %v246 = vld [vmem:[#allocation3 + $0x1d8] sm:$0xff]
    %v247 = vld [vmem:[#allocation3 + $0x1e0] sm:$0xff]
    %v248 = vld [vmem:[#allocation3 + $0x1e8] sm:$0xff]
    %v249 = vld [vmem:[#allocation3 + $0x1f0] sm:$0xff]
    %v250 = vld [vmem:[#allocation3 + $0x1f8] sm:$0xff]
    %v251 = vld [vmem:[%s4] sm:$0x3]
    %v253 = vlaneseq
    %v254 = vshrl.u32 %v253, 7
    %v255 = vsub.s32 0, %v254
    %v256 = vrot.slane %v251, %v255
    %v257 = vlaneseq
    %v258 = vshrl.u32 %v257, 7
    %v259 = vsub.s32 1, %v258
    %v260 = vrot.slane %v251, %v259
    %263 = vmatprep.subr.mxu0 %v188
    %264 = vmatpush1.msra.mxu0 %v187
    %265 = vmatprep.subr.mxu0 %v190
    %266 = vmatpush1.msra.mxu0 %v189
    %267 = vmatprep.subr.mxu0 %v192
    %268 = vmatpush1.msra.mxu0 %v191
    %269 = vmatprep.subr.mxu0 %v194
    %270 = vmatpush1.msra.mxu0 %v193
    %271 = vmatprep.subr.mxu0 %v196
    %272 = vmatpush1.msra.mxu0 %v195
    %273 = vmatprep.subr.mxu0 %v198
    %274 = vmatpush1.msra.mxu0 %v197
    %275 = vmatprep.subr.mxu0 %v200
    %276 = vmatpush1.msra.mxu0 %v199
    %277 = vmatprep.subr.mxu0 %v202
    %278 = vmatpush1.msra.mxu0 %v201
    %279 = vmatprep.subr.mxu0 %v204
    %280 = vmatpush1.msra.mxu0 %v203
    %281 = vmatprep.subr.mxu0 %v206
    %282 = vmatpush1.msra.mxu0 %v205
    %283 = vmatprep.subr.mxu0 %v208
    %284 = vmatpush1.msra.mxu0 %v207
    %285 = vmatprep.subr.mxu0 %v210
    %286 = vmatpush1.msra.mxu0 %v209
    %287 = vmatprep.subr.mxu0 %v212
    %288 = vmatpush1.msra.mxu0 %v211
    %289 = vmatprep.subr.mxu0 %v214
    %290 = vmatpush1.msra.mxu0 %v213
    %291 = vmatprep.subr.mxu0 %v216
    %292 = vmatpush1.msra.mxu0 %v215
    %293 = vmatprep.subr.mxu0 %v218
    %294 = vmatpush1.msra.mxu0 %v217
    %295 = vmatprep.subr.mxu0 %v220
    %296 = vmatpush1.msra.mxu0 %v219
    %297 = vmatprep.subr.mxu0 %v222
    %298 = vmatpush1.msra.mxu0 %v221
    %299 = vmatprep.subr.mxu0 %v224
    %300 = vmatpush1.msra.mxu0 %v223
    %301 = vmatprep.subr.mxu0 %v226
    %302 = vmatpush1.msra.mxu0 %v225
    %303 = vmatprep.subr.mxu0 %v228
    %304 = vmatpush1.msra.mxu0 %v227
    %305 = vmatprep.subr.mxu0 %v230
    %306 = vmatpush1.msra.mxu0 %v229
    %307 = vmatprep.subr.mxu0 %v232
    %308 = vmatpush1.msra.mxu0 %v231
    %309 = vmatprep.subr.mxu0 %v234
    %310 = vmatpush1.msra.mxu0 %v233
    %311 = vmatprep.subr.mxu0 %v236
    %312 = vmatpush1.msra.mxu0 %v235
    %313 = vmatprep.subr.mxu0 %v238
    %314 = vmatpush1.msra.mxu0 %v237
    %315 = vmatprep.subr.mxu0 %v240
    %316 = vmatpush1.msra.mxu0 %v239
    %317 = vmatprep.subr.mxu0 %v242
    %318 = vmatpush1.msra.mxu0 %v241
    %319 = vmatprep.subr.mxu0 %v244
    %320 = vmatpush1.msra.mxu0 %v243
    %321 = vmatprep.subr.mxu0 %v246
    %322 = vmatpush1.msra.mxu0 %v245
    %323 = vmatprep.subr.mxu0 %v248
    %324 = vmatpush1.msra.mxu0 %v247
    %325 = vmatprep.subr.mxu0 %v250
    %326 = vmatpush1.msra.mxu0 %v249
    %327 = vmatprep.mubr.f32.mxu0 %v186
    %328 = vmatmul.mubr.f32.gmra.mrb[0].mxu0 %v185
    %v329 = vpop.f32.mrb[0].mxu0
    %v330 = vadd.f32 %v256, %v329
    %v331 = vpop.f32.mrb[0].mxu0
    %v332 = vadd.f32 %v260, %v331
    %333 = vdwg.mxu0
    %v334 = vmax.f32 %v330, 0.0
    %v335 = vmax.f32 %v332, 0.0
    %v336 = vld [vmem:[#allocation5] sm:$0xff]
    %v337 = vld [vmem:[#allocation5 + $0x8] sm:$0xff]
    %v338 = vld [vmem:[#allocation5 + $0x10] sm:$0xff]
    %v339 = vld [vmem:[#allocation5 + $0x18] sm:$0xff]
    %v340 = vld [vmem:[#allocation5 + $0x20] sm:$0xff]
    %v341 = vld [vmem:[#allocation5 + $0x28] sm:$0xff]
    %v342 = vld [vmem:[#allocation5 + $0x30] sm:$0xff]
    %v343 = vld [vmem:[#allocation5 + $0x38] sm:$0xff]
    %v344 = vld [vmem:[#allocation5 + $0x40] sm:$0xff]
    %v345 = vld [vmem:[#allocation5 + $0x48] sm:$0xff]
    %v346 = vld [vmem:[#allocation5 + $0x50] sm:$0xff]
    %v347 = vld [vmem:[#allocation5 + $0x58] sm:$0xff]
    %v348 = vld [vmem:[#allocation5 + $0x60] sm:$0xff]
    %v349 = vld [vmem:[#allocation5 + $0x68] sm:$0xff]
    %v350 = vld [vmem:[#allocation5 + $0x70] sm:$0xff]
    %v351 = vld [vmem:[#allocation5 + $0x78] sm:$0xff]
    %v352 = vld [vmem:[#allocation5 + $0x80] sm:$0xff]
    %v353 = vld [vmem:[#allocation5 + $0x88] sm:$0xff]
    %v354 = vld [vmem:[#allocation5 + $0x90] sm:$0xff]
    %v355 = vld [vmem:[#allocation5 + $0x98] sm:$0xff]
    %v356 = vld [vmem:[#allocation5 + $0xa0] sm:$0xff]
    %v357 = vld [vmem:[#allocation5 + $0xa8] sm:$0xff]
    %v358 = vld [vmem:[#allocation5 + $0xb0] sm:$0xff]
    %v359 = vld [vmem:[#allocation5 + $0xb8] sm:$0xff]
    %v360 = vld [vmem:[#allocation5 + $0xc0] sm:$0xff]
    %v361 = vld [vmem:[#allocation5 + $0xc8] sm:$0xff]
    %v362 = vld [vmem:[#allocation5 + $0xd0] sm:$0xff]
    %v363 = vld [vmem:[#allocation5 + $0xd8] sm:$0xff]
    %v364 = vld [vmem:[#allocation5 + $0xe0] sm:$0xff]
    %v365 = vld [vmem:[#allocation5 + $0xe8] sm:$0xff]
    %v366 = vld [vmem:[#allocation5 + $0xf0] sm:$0xff]
    %v367 = vld [vmem:[#allocation5 + $0xf8] sm:$0xff]
    %v368 = vld [vmem:[%s6] sm:$0x1]
    %v370 = vlaneseq
    %v371 = vshrl.u32 %v370, 7
    %v372 = vsub.s32 0, %v371
    %v373 = vrot.slane %v368, %v372
    %375 = vmatprep.subr.mxu0 0.0
    %376 = vmatpush1.msra.mxu0 %v336
    %377 = vmatprep.subr.mxu0 0.0
    %378 = vmatpush1.msra.mxu0 %v337
    %379 = vmatprep.subr.mxu0 0.0
    %380 = vmatpush1.msra.mxu0 %v338
    %381 = vmatprep.subr.mxu0 0.0
    %382 = vmatpush1.msra.mxu0 %v339
    %383 = vmatprep.subr.mxu0 0.0
    %384 = vmatpush1.msra.mxu0 %v340
    %385 = vmatprep.subr.mxu0 0.0
    %386 = vmatpush1.msra.mxu0 %v341
    %387 = vmatprep.subr.mxu0 0.0
    %388 = vmatpush1.msra.mxu0 %v342
    %389 = vmatprep.subr.mxu0 0.0
    %390 = vmatpush1.msra.mxu0 %v343
    %391 = vmatprep.subr.mxu0 0.0
    %392 = vmatpush1.msra.mxu0 %v344
    %393 = vmatprep.subr.mxu0 0.0
    %394 = vmatpush1.msra.mxu0 %v345
    %395 = vmatprep.subr.mxu0 0.0
    %396 = vmatpush1.msra.mxu0 %v346
    %397 = vmatprep.subr.mxu0 0.0
    %398 = vmatpush1.msra.mxu0 %v347
    %399 = vmatprep.subr.mxu0 0.0
    %400 = vmatpush1.msra.mxu0 %v348
    %401 = vmatprep.subr.mxu0 0.0
    %402 = vmatpush1.msra.mxu0 %v349
    %403 = vmatprep.subr.mxu0 0.0
    %404 = vmatpush1.msra.mxu0 %v350
    %405 = vmatprep.subr.mxu0 0.0
    %406 = vmatpush1.msra.mxu0 %v351
    %407 = vmatprep.subr.mxu0 0.0
    %408 = vmatpush1.msra.mxu0 %v352
    %409 = vmatprep.subr.mxu0 0.0
    %410 = vmatpush1.msra.mxu0 %v353
    %411 = vmatprep.subr.mxu0 0.0
    %412 = vmatpush1.msra.mxu0 %v354
    %413 = vmatprep.subr.mxu0 0.0
    %414 = vmatpush1.msra.mxu0 %v355
    %415 = vmatprep.subr.mxu0 0.0
    %416 = vmatpush1.msra.mxu0 %v356
    %417 = vmatprep.subr.mxu0 0.0
    %418 = vmatpush1.msra.mxu0 %v357
    %419 = vmatprep.subr.mxu0 0.0
    %420 = vmatpush1.msra.mxu0 %v358
    %421 = vmatprep.subr.mxu0 0.0
    %422 = vmatpush1.msra.mxu0 %v359
    %423 = vmatprep.subr.mxu0 0.0
    %424 = vmatpush1.msra.mxu0 %v360
    %425 = vmatprep.subr.mxu0 0.0
    %426 = vmatpush1.msra.mxu0 %v361
    %427 = vmatprep.subr.mxu0 0.0
    %428 = vmatpush1.msra.mxu0 %v362
    %429 = vmatprep.subr.mxu0 0.0
    %430 = vmatpush1.msra.mxu0 %v363
    %431 = vmatprep.subr.mxu0 0.0
    %432 = vmatpush1.msra.mxu0 %v364
    %433 = vmatprep.subr.mxu0 0.0
    %434 = vmatpush1.msra.mxu0 %v365
    %435 = vmatprep.subr.mxu0 0.0
    %436 = vmatpush1.msra.mxu0 %v366
    %437 = vmatprep.subr.mxu0 0.0
    %438 = vmatpush1.msra.mxu0 %v367
    %439 = vmatprep.mubr.f32.mxu0 %v335
    %440 = vmatmul.mubr.f32.gmra.mrb[0].mxu0 %v334
    %v441 = vpop.f32.mrb[0].mxu0
    %v442 = vadd.f32 %v373, %v441
    %v443 = vpop.f32.mrb[0].mxu0
    %444 = vdwg.mxu0
    %v445 = vmax.f32 %v442, 0.0
    %v446 = vld [vmem:[#allocation7] sm:$0xff]
    %v447 = vld [vmem:[#allocation7 + $0x8] sm:$0xff]
    %v448 = vld [vmem:[#allocation7 + $0x10] sm:$0xff]
    %v449 = vld [vmem:[#allocation7 + $0x18] sm:$0xff]
    %v450 = vld [vmem:[#allocation7 + $0x20] sm:$0xff]
    %v451 = vld [vmem:[#allocation7 + $0x28] sm:$0xff]
    %v452 = vld [vmem:[#allocation7 + $0x30] sm:$0xff]
    %v453 = vld [vmem:[#allocation7 + $0x38] sm:$0xff]
    %v454 = vld [vmem:[#allocation7 + $0x40] sm:$0xff]
    %v455 = vld [vmem:[#allocation7 + $0x48] sm:$0xff]
    %v456 = vld [vmem:[#allocation7 + $0x50] sm:$0xff]
    %v457 = vld [vmem:[#allocation7 + $0x58] sm:$0xff]
    %v458 = vld [vmem:[#allocation7 + $0x60] sm:$0xff]
    %v459 = vld [vmem:[#allocation7 + $0x68] sm:$0xff]
    %v460 = vld [vmem:[#allocation7 + $0x70] sm:$0xff]
    %v461 = vld [vmem:[#allocation7 + $0x78] sm:$0xff]
    %v462 = vld [vmem:[%s8] sm:$0x1]
    %v464 = vlaneseq
    %v465 = vshrl.u32 %v464, 7
    %v466 = vsub.s32 0, %v465
    %v467 = vrot.slane %v462, %v466
    %469 = vmatprep.subr.mxu0 0.0
    %470 = vmatpush1.msra.mxu0 %v446
    %471 = vmatprep.subr.mxu0 0.0
    %472 = vmatpush1.msra.mxu0 %v447
    %473 = vmatprep.subr.mxu0 0.0
    %474 = vmatpush1.msra.mxu0 %v448
    %475 = vmatprep.subr.mxu0 0.0
    %476 = vmatpush1.msra.mxu0 %v449
    %477 = vmatprep.subr.mxu0 0.0
    %478 = vmatpush1.msra.mxu0 %v450
    %479 = vmatprep.subr.mxu0 0.0
    %480 = vmatpush1.msra.mxu0 %v451
    %481 = vmatprep.subr.mxu0 0.0
    %482 = vmatpush1.msra.mxu0 %v452
    %483 = vmatprep.subr.mxu0 0.0
    %484 = vmatpush1.msra.mxu0 %v453
    %485 = vmatprep.subr.mxu0 0.0
    %486 = vmatpush1.msra.mxu0 %v454
    %487 = vmatprep.subr.mxu0 0.0
    %488 = vmatpush1.msra.mxu0 %v455
    %489 = vmatprep.subr.mxu0 0.0
    %490 = vmatpush1.msra.mxu0 %v456
    %491 = vmatprep.subr.mxu0 0.0
    %492 = vmatpush1.msra.mxu0 %v457
    %493 = vmatprep.subr.mxu0 0.0
    %494 = vmatpush1.msra.mxu0 %v458
    %495 = vmatprep.subr.mxu0 0.0
    %496 = vmatpush1.msra.mxu0 %v459
    %497 = vmatprep.subr.mxu0 0.0
    %498 = vmatpush1.msra.mxu0 %v460
    %499 = vmatprep.subr.mxu0 0.0
    %500 = vmatpush1.msra.mxu0 %v461
    %501 = vmatprep.subr.mxu0 0.0
    %502 = vmatpush1.msra.mxu0 0.0
    %503 = vmatprep.subr.mxu0 0.0
    %504 = vmatpush1.msra.mxu0 0.0
    %505 = vmatprep.subr.mxu0 0.0
    %506 = vmatpush1.msra.mxu0 0.0
    %507 = vmatprep.subr.mxu0 0.0
    %508 = vmatpush1.msra.mxu0 0.0
    %509 = vmatprep.subr.mxu0 0.0
    %510 = vmatpush1.msra.mxu0 0.0
    %511 = vmatprep.subr.mxu0 0.0
    %512 = vmatpush1.msra.mxu0 0.0
    %513 = vmatprep.subr.mxu0 0.0
    %514 = vmatpush1.msra.mxu0 0.0
    %515 = vmatprep.subr.mxu0 0.0
    %516 = vmatpush1.msra.mxu0 0.0
    %517 = vmatprep.subr.mxu0 0.0
    %518 = vmatpush1.msra.mxu0 0.0
    %519 = vmatprep.subr.mxu0 0.0
    %520 = vmatpush1.msra.mxu0 0.0
    %521 = vmatprep.subr.mxu0 0.0
    %522 = vmatpush1.msra.mxu0 0.0
    %523 = vmatprep.subr.mxu0 0.0
    %524 = vmatpush1.msra.mxu0 0.0
    %525 = vmatprep.subr.mxu0 0.0
    %526 = vmatpush1.msra.mxu0 0.0
    %527 = vmatprep.subr.mxu0 0.0
    %528 = vmatpush1.msra.mxu0 0.0
    %529 = vmatprep.subr.mxu0 0.0
    %530 = vmatpush1.msra.mxu0 0.0
    %531 = vmatprep.subr.mxu0 0.0
    %532 = vmatpush1.msra.mxu0 0.0
    %533 = vmatprep.mubr.f32.mxu0 0.0
    %534 = vmatmul.mubr.f32.gmra.mrb[0].mxu0 %v445
    %v535 = vpop.f32.mrb[0].mxu0
    %v536 = vadd.f32 %v467, %v535
    %v537 = vpop.f32.mrb[0].mxu0
    %538 = vdwg.mxu0
    %v539 = vmax.f32 %v536, 0.0
    %v540 = vld [vmem:[%s9] sm:$0xff]
    %v541 = vld [vmem:[%s9 + $0x8] sm:$0xff]
    %v542 = vld [vmem:[%s9 + $0x10] sm:$0xff]
    %v543 = vld [vmem:[%s9 + $0x18] sm:$0xff]
    %v544 = vld [vmem:[%s9 + $0x20] sm:$0xff]
    %v545 = vld [vmem:[%s9 + $0x28] sm:$0xff]
    %v546 = vld [vmem:[%s9 + $0x30] sm:$0xff]
    %v547 = vld [vmem:[%s9 + $0x38] sm:$0xff]
    %v548 = vld [vmem:[%s9 + $0x40] sm:$0xff]
    %v549 = vld [vmem:[%s9 + $0x48] sm:$0xff]
    %v550 = vld [vmem:[%s9 + $0x50] sm:$0xff]
    %v551 = vld [vmem:[%s9 + $0x58] sm:$0xff]
    %v552 = vld [vmem:[%s9 + $0x60] sm:$0xff]
    %v553 = vld [vmem:[%s9 + $0x68] sm:$0xff]
    %v554 = vld [vmem:[%s9 + $0x70] sm:$0xff]
    %v555 = vld [vmem:[%s9 + $0x78] sm:$0xff]
    %v556 = vld [vmem:[#allocation2] sm:$0x1]
    %v558 = vlaneseq
    %v559 = vshrl.u32 %v558, 7
    %v560 = vsub.s32 0, %v559
    %v561 = vrot.slane %v556, %v560
    %563 = vmatprep.subr.mxu0 0.0
    %564 = vmatpush1.msra.mxu0 %v540
    %565 = vmatprep.subr.mxu0 0.0
    %566 = vmatpush1.msra.mxu0 %v541
    %567 = vmatprep.subr.mxu0 0.0
    %568 = vmatpush1.msra.mxu0 %v542
    %569 = vmatprep.subr.mxu0 0.0
    %570 = vmatpush1.msra.mxu0 %v543
    %571 = vmatprep.subr.mxu0 0.0
    %572 = vmatpush1.msra.mxu0 %v544
    %573 = vmatprep.subr.mxu0 0.0
    %574 = vmatpush1.msra.mxu0 %v545
    %575 = vmatprep.subr.mxu0 0.0
    %576 = vmatpush1.msra.mxu0 %v546
    %577 = vmatprep.subr.mxu0 0.0
    %578 = vmatpush1.msra.mxu0 %v547
    %579 = vmatprep.subr.mxu0 0.0
    %580 = vmatpush1.msra.mxu0 %v548
    %581 = vmatprep.subr.mxu0 0.0
    %582 = vmatpush1.msra.mxu0 %v549
    %583 = vmatprep.subr.mxu0 0.0
    %584 = vmatpush1.msra.mxu0 %v550
    %585 = vmatprep.subr.mxu0 0.0
    %586 = vmatpush1.msra.mxu0 %v551
    %587 = vmatprep.subr.mxu0 0.0
    %588 = vmatpush1.msra.mxu0 %v552
    %589 = vmatprep.subr.mxu0 0.0
    %590 = vmatpush1.msra.mxu0 %v553
    %591 = vmatprep.subr.mxu0 0.0
    %592 = vmatpush1.msra.mxu0 %v554
    %593 = vmatprep.subr.mxu0 0.0
    %594 = vmatpush1.msra.mxu0 %v555
    %595 = vmatprep.subr.mxu0 0.0
    %596 = vmatpush1.msra.mxu0 0.0
    %597 = vmatprep.subr.mxu0 0.0
    %598 = vmatpush1.msra.mxu0 0.0
    %599 = vmatprep.subr.mxu0 0.0
    %600 = vmatpush1.msra.mxu0 0.0
    %601 = vmatprep.subr.mxu0 0.0
    %602 = vmatpush1.msra.mxu0 0.0
    %603 = vmatprep.subr.mxu0 0.0
    %604 = vmatpush1.msra.mxu0 0.0
    %605 = vmatprep.subr.mxu0 0.0
    %606 = vmatpush1.msra.mxu0 0.0
    %607 = vmatprep.subr.mxu0 0.0
    %608 = vmatpush1.msra.mxu0 0.0
    %609 = vmatprep.subr.mxu0 0.0
    %610 = vmatpush1.msra.mxu0 0.0
    %611 = vmatprep.subr.mxu0 0.0
    %612 = vmatpush1.msra.mxu0 0.0
    %613 = vmatprep.subr.mxu0 0.0
    %614 = vmatpush1.msra.mxu0 0.0
    %615 = vmatprep.subr.mxu0 0.0
    %616 = vmatpush1.msra.mxu0 0.0
    %617 = vmatprep.subr.mxu0 0.0
    %618 = vmatpush1.msra.mxu0 0.0
    %619 = vmatprep.subr.mxu0 0.0
    %620 = vmatpush1.msra.mxu0 0.0
    %621 = vmatprep.subr.mxu0 0.0
    %622 = vmatpush1.msra.mxu0 0.0
    %623 = vmatprep.subr.mxu0 0.0
    %624 = vmatpush1.msra.mxu0 0.0
    %625 = vmatprep.subr.mxu0 0.0
    %626 = vmatpush1.msra.mxu0 0.0
    %627 = vmatprep.mubr.f32.mxu0 0.0
    %628 = vmatmul.mubr.f32.gmra.mrb[0].mxu0 %v539
    %v629 = vpop.f32.mrb[0].mxu0
    %v630 = vadd.f32 %v561, %v629
    %v631 = vpop.f32.mrb[0].mxu0
    %632 = vdwg.mxu0
    %vm633 = vcmask 1024
    %634 = vst.msk [vmem:[%s11] sm:$0x3] %vm633, %v630
    // Predicated region
    $region58: #{critic_forward.1} parent=1 // pred_check
      _
    $region59: #{critic_forward.1} parent=1 // pred_check_branch
      %636 = sbr.rel (0) target = $region61
    $region60: #{critic_forward.1} parent=1 // pred_region
      _
    $region61: #{critic_forward.1} parent=1 // pred_fallthru
      _
    // Predicated region
    $region62: #{critic_forward.1} parent=1 // pred_check
      _
    $region63: #{critic_forward.1} parent=1 // pred_check_branch
      %638 = sbr.rel (0) target = $region65
    $region64: #{critic_forward.1} parent=1 // pred_region
      _
    $region65: #{critic_forward.1} parent=1 // pred_fallthru
      _
    %639 = vsyncpa [#allocation4], 1
    %640 = vsyncpa [#allocation6], 1

</llo_original>
